<compile_context>
chip_gen: v5e
topology: v5e:2x2
jax: 0.10.0
libtpu: 0.0.40
codegen_flags: <defaults>
</compile_context>

<pallas_src>
import numpy as np
import jax
import jax.numpy as jnp
from jax import lax
from jax.experimental import pallas as pl
from jax.experimental.pallas import tpu as pltpu

LN_EPS = 1e-6


def _group_attention_kernel(ctx_ref, prior_ref, gamma_ref, beta_ref, w_ref, bias_ref,
                            gij_ref, mij_ref):
    """One grid step handles a (Bb, S, :) block of batch elements."""
    Bb, S, D = ctx_ref.shape

    x = ctx_ref[...]                       # (Bb, S, D)
    prior = prior_ref[...]                 # (Bb, S, S)

    # --- LayerNorm over d_model (unbiased std; eps added to std) ---
    mean = jnp.mean(x, axis=-1, keepdims=True)
    var = jnp.sum((x - mean) ** 2, axis=-1, keepdims=True) / (D - 1)
    normed = gamma_ref[...] * (x - mean) / (jnp.sqrt(var) + LN_EPS) + beta_ref[...]   # (Bb,S,D)

    # --- reassociated fc: p1[b,j] = normed[b,j,:].w1 ; p2[b,j] = normed[b,j,:].w2 ---
    # (no (S*S, D) concat / segment-mean tensors are ever materialized)
    w_b = jnp.broadcast_to(w_ref[...], (Bb, 2, D))                       # row0 = w1, row1 = w2
    p = jnp.einsum('bkd,bsd->bks', w_b, normed,
                   preferred_element_type=jnp.float32)                   # (Bb, 2, S)
    p1_row = p[:, 0:1, :]                                                # (Bb, 1, S)
    p2_row = p[:, 1:2, :]                                                # (Bb, 1, S)

    # --- pairwise segment means of p2 via prefix sums, directly in (S, S) layout ---
    row = lax.broadcasted_iota(jnp.int32, (S, S), 0)
    col = lax.broadcasted_iota(jnp.int32, (S, S), 1)
    upper = col >= row                                                   # j >= i

    u_incl = upper.astype(jnp.float32)            # [r <= j]  (first idx = r, second = j)
    l_excl = (col < row).astype(jnp.float32)      # [r <  i]  (first idx = i, second = r)
    u_b = jnp.broadcast_to(u_incl, (Bb, S, S))
    l_b = jnp.broadcast_to(l_excl, (Bb, S, S))

    cs_row = jnp.einsum('bkr,brj->bkj', p2_row, u_b,
                        preferred_element_type=jnp.float32)              # (Bb,1,S): sum_{r<=j} p2
    cs_excl = jnp.einsum('bir,bkr->bik', l_b, p2_row,
                         preferred_element_type=jnp.float32)             # (Bb,S,1): sum_{r< i} p2

    seg_len = (col - row + 1).astype(jnp.float32)
    inv_len = upper.astype(jnp.float32) / jnp.where(upper, seg_len, 1.0)  # (S,S): 1/(j-i+1) on triu
    seg_mean = (cs_row - cs_excl) * inv_len                               # (Bb,S,S)

    # Masked concat + fc + sigmoid.
    # TODO(synk): the structural j>=i mask replaces the original elementwise
    # masked_fill(context_mean == 0); they differ only if a per-feature segment mean is
    # exactly 0.0 inside the upper triangle (measure-zero for float inputs).
    logits = jnp.where(upper, p1_row + seg_mean, 0.0) + bias_ref[...]     # (Bb,S,S)
    sig = 1.0 / (1.0 + jnp.exp(-logits))
    mij = prior + (1.0 - prior) * sig
    mij_ref[...] = mij.astype(mij_ref.dtype)

    # --- Gij: strictly-lower filled with 1, cumprod along columns, triu, symmetrize, diag=1 ---
    gfill = jnp.where(upper, mij, 1.0)
    acc = jnp.ones((Bb, S, 1), jnp.float32)
    gcum = jnp.zeros((Bb, S, S), jnp.float32)
    for k in range(S):                               # S is small & static -> fully unrolled
        acc = acc * gfill[:, :, k:k + 1]             # plain static lane slice (no masked XLU sum)
        gcum = jnp.where(col == k, acc, gcum)
    gup = jnp.where(upper, gcum, 0.0)                # triu

    eye = row == col
    for b in range(Bb):                              # per-batch 2-D XLU transpose + symmetrize
        gup_b = gup[b]                               # (S, S)
        gsym_b = gup_b + gup_b.T
        # diagonal of (gup + gup.T) is 2*Mii; subtracting (diag - 1) leaves exactly 1.
        gij_ref[b] = jnp.where(eye, 1.0, gsym_b).astype(gij_ref.dtype)


def group_attention_one_dim(context, eos_mask, prior, gamma, beta, fc_w, fc_b,
                            *, batch_block=8):
    """Pallas implementation of GroupAttention_one_dim.forward. Returns (Gij, Mij)."""
    del eos_mask   # accepted for signature parity; the PyTorch forward never reads it
    B, S, D = context.shape

    # Batch several elements per grid step to amortize per-step overhead, but keep at least
    # two grid steps when B > 1 so multi-TensorCore parts (v7x megacore) don't idle.
    bb = max(1, min(batch_block, B))
    if B > 1 and pl.cdiv(B, bb) < 2:
        bb = max(1, (B + 1) // 2)
    n_blocks = pl.cdiv(B, bb)
    Bp = n_blocks * bb

    ctx = context.astype(jnp.float32)
    pri = prior.astype(jnp.float32)
    if Bp != B:   # pad batch to a multiple of the block (zeros are benign for this math)
        ctx = jnp.pad(ctx, ((0, Bp - B), (0, 0), (0, 0)))
        pri = jnp.pad(pri, ((0, Bp - B), (0, 0), (0, 0)))

    gamma2 = gamma.reshape(1, D).astype(jnp.float32)
    beta2 = beta.reshape(1, D).astype(jnp.float32)
    w2d = fc_w.reshape(2, D).astype(jnp.float32)       # torch Linear(2D,1): row0 = w1, row1 = w2
    fcb = fc_b.reshape(1, 1).astype(jnp.float32)

    grid_spec = pltpu.PrefetchScalarGridSpec(
        num_scalar_prefetch=0,
        grid=(n_blocks,),
        in_specs=[
            pl.BlockSpec((bb, S, D), lambda b: (b, 0, 0)),   # context block
            pl.BlockSpec((bb, S, S), lambda b: (b, 0, 0)),   # prior block
            pl.BlockSpec((1, D), lambda b: (0, 0)),          # layernorm gamma
            pl.BlockSpec((1, D), lambda b: (0, 0)),          # layernorm beta
            pl.BlockSpec((2, D), lambda b: (0, 0)),          # fc weight rows (w1; w2)
            pl.BlockSpec((1, 1), lambda b: (0, 0)),          # fc bias
        ],
        out_specs=[
            pl.BlockSpec((bb, S, S), lambda b: (b, 0, 0)),   # Gij
            pl.BlockSpec((bb, S, S), lambda b: (b, 0, 0)),   # Mij
        ],
    )
    gij, mij = pl.pallas_call(
        _group_attention_kernel,
        out_shape=(jax.ShapeDtypeStruct((Bp, S, S), jnp.float32),
                   jax.ShapeDtypeStruct((Bp, S, S), jnp.float32)),
        grid_spec=grid_spec,
        compiler_params=pltpu.CompilerParams(dimension_semantics=("parallel",)),
    )(ctx, pri, gamma2, beta2, w2d, fcb)
    return gij[:B], mij[:B]


# ----------------------------- pure-JAX reference (mirrors PyTorch) -----------------------------
def _mean_matrix_all(S):
    """mean_mask[i, r, j] = 1/(j-i+1) if i <= r <= j else 0  (== torch mean_matrix_all)."""
    i = np.arange(S)[:, None, None]
    r = np.arange(S)[None, :, None]
    j = np.arange(S)[None, None, :]
    valid = (r >= i) & (r <= j)
    return jnp.asarray(np.where(valid, 1.0 / (j - i + 1.0), 0.0), jnp.float32)


def reference_forward(context, prior, gamma, beta, fc_w, fc_b):
    B, S, D = context.shape
    mean = jnp.mean(context, axis=-1, keepdims=True)
    var = jnp.sum((context - mean) ** 2, axis=-1, keepdims=True) / (D - 1)
    normed = gamma * (context - mean) / (jnp.sqrt(var) + LN_EPS) + beta          # (B,S,D)

    mean_mask = _mean_matrix_all(S)                                              # [i, r, j]
    cmean = jnp.einsum('irj,brd->bijd', mean_mask, normed)                       # (B,S,S,D)
    c1 = jnp.broadcast_to(normed[:, None, :, :], (B, S, S, D))                   # c1[b,i,j,:]=normed[b,j,:]
    c1m = jnp.where(cmean == 0.0, 0.0, c1)

    w = fc_w.reshape(2 * D)
    logits = (jnp.einsum('bijd,d->bij', c1m, w[:D])
              + jnp.einsum('bijd,d->bij', cmean, w[D:]) + fc_b.reshape(()))
    mij = 1.0 / (1.0 + jnp.exp(-logits))
    mij = prior + (1.0 - prior) * mij

    row = jnp.arange(S)[:, None]
    col = jnp.arange(S)[None, :]
    upper = col >= row
    gfill = jnp.where(upper, mij, 1.0)
    gcum = jnp.cumprod(gfill, axis=-1)
    gup = jnp.where(upper, gcum, 0.0)
    gsym = gup + jnp.swapaxes(gup, 1, 2)
    diag = jnp.sum(jnp.where(row == col, gsym, 0.0), axis=-1, keepdims=True)
    gij = gsym - jnp.where(row == col, diag - 1.0, 0.0)
    return gij, mij


if __name__ == "__main__":
    key = jax.random.PRNGKey(0)

    # (B, S, D): second config exercises batched grid steps (Bb > 1) plus batch padding.
    for B, S, D in ((2, 8, 32), (5, 8, 32)):
        k1, k2, k3, k4 = jax.random.split(jax.random.fold_in(key, B), 4)
        context = jax.random.normal(k1, (B, S, D), jnp.float32)
        prior = jax.random.uniform(k2, (B, S, S), jnp.float32)
        eos_mask = jnp.ones((B, S), jnp.float32)   # unused by the forward

        bound = 1.0 / np.sqrt(2.0 * D)             # nn.Linear(2D,1) default uniform init range
        fc_w = (jax.random.uniform(k3, (1, 2 * D), jnp.float32) * 2.0 - 1.0) * bound
        fc_b = (jax.random.uniform(k4, (1,), jnp.float32) * 2.0 - 1.0) * bound
        gamma = jnp.ones((D,), jnp.float32)        # LayerNorm default init
        beta = jnp.zeros((D,), jnp.float32)

        gij, mij = group_attention_one_dim(context, eos_mask, prior, gamma, beta, fc_w, fc_b)
        jax.block_until_ready((gij, mij))

        gij_ref, mij_ref = reference_forward(context, prior, gamma, beta, fc_w, fc_b)
        assert bool(jnp.allclose(mij, mij_ref, rtol=1e-3, atol=1e-3)), f"Mij mismatch (B={B})"
        assert bool(jnp.allclose(gij, gij_ref, rtol=1e-3, atol=1e-3)), f"Gij mismatch (B={B})"

    print("KERNEL_OK")
</pallas_src>

<mosaic_0001>
module attributes {stable_mosaic.version = 11 : i64} {
  func.func @_group_attention_kernel(%arg0: i32, %arg1: memref<1x8x32xf32, #tpu.memory_space<vmem>>, %arg2: memref<1x8x8xf32, #tpu.memory_space<vmem>>, %arg3: memref<1x32xf32, #tpu.memory_space<vmem>>, %arg4: memref<1x32xf32, #tpu.memory_space<vmem>>, %arg5: memref<2x32xf32, #tpu.memory_space<vmem>>, %arg6: memref<1x1xf32, #tpu.memory_space<vmem>>, %arg7: memref<1x8x8xf32, #tpu.memory_space<vmem>>, %arg8: memref<1x8x8xf32, #tpu.memory_space<vmem>>) attributes {dimension_semantics = [#tpu.dimension_semantics<parallel>], iteration_bounds = array<i64: 2>, scalar_prefetch = 0 : i64, scratch_operands = 0 : i64, tpu.core_type = #tpu.core_type<tc>, window_params = [{transform_indices = @transform_0, window_bounds = array<i64: 1, 8, 32>}, {transform_indices = @transform_1, window_bounds = array<i64: 1, 8, 8>}, {pipeline_mode = #tpu.pipeline_mode<synchronous>, transform_indices = @transform_2, window_bounds = array<i64: 1, 32>}, {pipeline_mode = #tpu.pipeline_mode<synchronous>, transform_indices = @transform_3, window_bounds = array<i64: 1, 32>}, {pipeline_mode = #tpu.pipeline_mode<synchronous>, transform_indices = @transform_4, window_bounds = array<i64: 2, 32>}, {pipeline_mode = #tpu.pipeline_mode<synchronous>, transform_indices = @transform_5, window_bounds = array<i64: 1, 1>}, {transform_indices = @transform_6, window_bounds = array<i64: 1, 8, 8>}, {transform_indices = @transform_7, window_bounds = array<i64: 1, 8, 8>}]} {
    %c0 = arith.constant 0 : index
    %c0_0 = arith.constant 0 : index
    %c0_1 = arith.constant 0 : index
    %0 = vector.load %arg1[%c0, %c0_0, %c0_1] : memref<1x8x32xf32, #tpu.memory_space<vmem>>, vector<1x8x32xf32>
    %c0_2 = arith.constant 0 : index
    %c0_3 = arith.constant 0 : index
    %c0_4 = arith.constant 0 : index
    %1 = vector.load %arg2[%c0_2, %c0_3, %c0_4] : memref<1x8x8xf32, #tpu.memory_space<vmem>>, vector<1x8x8xf32>
    %cst = arith.constant dense<0.000000e+00> : vector<1x8xf32>
    %2 = vector.multi_reduction <add>, %0, %cst [2] : vector<1x8x32xf32> to vector<1x8xf32>
    %3 = vector.shape_cast %2 : vector<1x8xf32> to vector<1x8x1xf32>
    %cst_5 = arith.constant 3.200000e+01 : f32
    %4 = vector.broadcast %cst_5 : f32 to vector<1x8x1xf32>
    %5 = arith.divf %3, %4 : vector<1x8x1xf32>
    %6 = vector.broadcast %5 : vector<1x8x1xf32> to vector<1x8x32xf32>
    %7 = arith.subf %0, %6 : vector<1x8x32xf32>
    %8 = arith.mulf %7, %7 : vector<1x8x32xf32>
    %cst_6 = arith.constant dense<0.000000e+00> : vector<1x8xf32>
    %9 = vector.multi_reduction <add>, %8, %cst_6 [2] : vector<1x8x32xf32> to vector<1x8xf32>
    %10 = vector.shape_cast %9 : vector<1x8xf32> to vector<1x8x1xf32>
    %cst_7 = arith.constant 3.100000e+01 : f32
    %11 = vector.broadcast %cst_7 : f32 to vector<1x8x1xf32>
    %12 = arith.divf %10, %11 : vector<1x8x1xf32>
    %c0_8 = arith.constant 0 : index
    %c0_9 = arith.constant 0 : index
    %13 = vector.load %arg3[%c0_8, %c0_9] : memref<1x32xf32, #tpu.memory_space<vmem>>, vector<1x32xf32>
    %14 = vector.broadcast %5 : vector<1x8x1xf32> to vector<1x8x32xf32>
    %15 = arith.subf %0, %14 : vector<1x8x32xf32>
    %16 = vector.shape_cast %13 : vector<1x32xf32> to vector<1x1x32xf32>
    %17 = vector.broadcast %16 : vector<1x1x32xf32> to vector<1x8x32xf32>
    %18 = arith.mulf %17, %15 : vector<1x8x32xf32>
    %19 = math.sqrt %12 : vector<1x8x1xf32>
    %cst_10 = arith.constant 9.99999997E-7 : f32
    %20 = vector.broadcast %cst_10 : f32 to vector<1x8x1xf32>
    %21 = arith.addf %19, %20 : vector<1x8x1xf32>
    %22 = vector.broadcast %21 : vector<1x8x1xf32> to vector<1x8x32xf32>
    %23 = arith.divf %18, %22 : vector<1x8x32xf32>
    %c0_11 = arith.constant 0 : index
    %c0_12 = arith.constant 0 : index
    %24 = vector.load %arg4[%c0_11, %c0_12] : memref<1x32xf32, #tpu.memory_space<vmem>>, vector<1x32xf32>
    %25 = vector.shape_cast %24 : vector<1x32xf32> to vector<1x1x32xf32>
    %26 = vector.broadcast %25 : vector<1x1x32xf32> to vector<1x8x32xf32>
    %27 = arith.addf %23, %26 : vector<1x8x32xf32>
    %c0_13 = arith.constant 0 : index
    %c0_14 = arith.constant 0 : index
    %28 = vector.load %arg5[%c0_13, %c0_14] : memref<2x32xf32, #tpu.memory_space<vmem>>, vector<2x32xf32>
    %29 = vector.shape_cast %28 : vector<2x32xf32> to vector<1x2x32xf32>
    "tpu.trace_start"() <{level = 10 : i32, message = "bkd,bsd->bks"}> : () -> ()
    %cst_15 = arith.constant dense<0.000000e+00> : vector<1x2x8xf32>
    %30 = tpu.matmul %29, %27, %cst_15 {dimension_numbers = #tpu.dot_dimension_numbers<[2], [2], [1], [1], [0, 0, 0, 1, 1, 1], [0], [0]>} : vector<1x2x32xf32>, vector<1x8x32xf32>, vector<1x2x8xf32> -> vector<1x2x8xf32>
    "tpu.trace_stop"() : () -> ()
    %31 = vector.extract_strided_slice %30 {offsets = [0, 0, 0], sizes = [1, 1, 8], strides = [1, 1, 1]} : vector<1x2x8xf32> to vector<1x1x8xf32>
    %32 = vector.extract_strided_slice %30 {offsets = [0, 1, 0], sizes = [1, 1, 8], strides = [1, 1, 1]} : vector<1x2x8xf32> to vector<1x1x8xf32>
    %33 = tpu.iota {dimensions = array<i32: 0>} : vector<8x8xi32>
    %34 = tpu.iota {dimensions = array<i32: 1>} : vector<8x8xi32>
    %35 = arith.cmpi sge, %34, %33 : vector<8x8xi32>
    %36 = arith.extui %35 : vector<8x8xi1> to vector<8x8xi32>
    %37 = arith.sitofp %36 : vector<8x8xi32> to vector<8x8xf32>
    %38 = arith.cmpi slt, %34, %33 : vector<8x8xi32>
    %39 = arith.extui %38 : vector<8x8xi1> to vector<8x8xi32>
    %40 = arith.sitofp %39 : vector<8x8xi32> to vector<8x8xf32>
    %41 = vector.shape_cast %37 : vector<8x8xf32> to vector<1x8x8xf32>
    %42 = vector.shape_cast %40 : vector<8x8xf32> to vector<1x8x8xf32>
    "tpu.trace_start"() <{level = 10 : i32, message = "bkr,brj->bkj"}> : () -> ()
    %cst_16 = arith.constant dense<0.000000e+00> : vector<1x1x8xf32>
    %43 = tpu.matmul %32, %41, %cst_16 {dimension_numbers = #tpu.dot_dimension_numbers<[2], [1], [1], [2], [0, 0, 0, 1, 1, 2], [0], [0]>} : vector<1x1x8xf32>, vector<1x8x8xf32>, vector<1x1x8xf32> -> vector<1x1x8xf32>
    "tpu.trace_stop"() : () -> ()
    "tpu.trace_start"() <{level = 10 : i32, message = "bir,bkr->bik"}> : () -> ()
    %cst_17 = arith.constant dense<0.000000e+00> : vector<1x8x1xf32>
    %44 = tpu.matmul %42, %32, %cst_17 {dimension_numbers = #tpu.dot_dimension_numbers<[2], [2], [1], [1], [0, 0, 0, 1, 1, 1], [0], [0]>} : vector<1x8x8xf32>, vector<1x1x8xf32>, vector<1x8x1xf32> -> vector<1x8x1xf32>
    "tpu.trace_stop"() : () -> ()
    %45 = arith.subi %34, %33 : vector<8x8xi32>
    %c1_i32 = arith.constant 1 : i32
    %46 = vector.broadcast %c1_i32 : i32 to vector<8x8xi32>
    %47 = arith.addi %45, %46 : vector<8x8xi32>
    %48 = arith.sitofp %47 : vector<8x8xi32> to vector<8x8xf32>
    %49 = arith.extui %35 : vector<8x8xi1> to vector<8x8xi32>
    %50 = arith.sitofp %49 : vector<8x8xi32> to vector<8x8xf32>
    %cst_18 = arith.constant 1.000000e+00 : f32
    %51 = vector.broadcast %cst_18 : f32 to vector<8x8xf32>
    %52 = arith.select %35, %48, %51 : vector<8x8xi1>, vector<8x8xf32>
    %53 = arith.divf %50, %52 : vector<8x8xf32>
    %54 = vector.broadcast %43 : vector<1x1x8xf32> to vector<1x8x8xf32>
    %55 = vector.broadcast %44 : vector<1x8x1xf32> to vector<1x8x8xf32>
    %56 = arith.subf %54, %55 : vector<1x8x8xf32>
    %57 = vector.shape_cast %53 : vector<8x8xf32> to vector<1x8x8xf32>
    %58 = arith.mulf %56, %57 : vector<1x8x8xf32>
    %59 = vector.broadcast %31 : vector<1x1x8xf32> to vector<1x8x8xf32>
    %60 = arith.addf %59, %58 : vector<1x8x8xf32>
    %cst_19 = arith.constant 0.000000e+00 : f32
    %61 = vector.shape_cast %35 : vector<8x8xi1> to vector<1x8x8xi1>
    %62 = vector.broadcast %cst_19 : f32 to vector<1x8x8xf32>
    %63 = arith.select %61, %60, %62 : vector<1x8x8xi1>, vector<1x8x8xf32>
    %c0_20 = arith.constant 0 : index
    %c0_21 = arith.constant 0 : index
    %64 = vector.load %arg6[%c0_20, %c0_21] : memref<1x1xf32, #tpu.memory_space<vmem>>, vector<1x1xf32>
    %65 = vector.shape_cast %64 : vector<1x1xf32> to vector<1x1x1xf32>
    %66 = vector.broadcast %65 : vector<1x1x1xf32> to vector<1x8x8xf32>
    %67 = arith.addf %63, %66 : vector<1x8x8xf32>
    %cst_22 = arith.constant 0.000000e+00 : f32
    %68 = vector.broadcast %cst_22 : f32 to vector<1x8x8xf32>
    %69 = arith.subf %68, %67 : vector<1x8x8xf32>
    %70 = math.exp %69 : vector<1x8x8xf32>
    %cst_23 = arith.constant 1.000000e+00 : f32
    %71 = vector.broadcast %cst_23 : f32 to vector<1x8x8xf32>
    %72 = arith.addf %71, %70 : vector<1x8x8xf32>
    %cst_24 = arith.constant 1.000000e+00 : f32
    %73 = vector.broadcast %cst_24 : f32 to vector<1x8x8xf32>
    %74 = arith.divf %73, %72 : vector<1x8x8xf32>
    %cst_25 = arith.constant 1.000000e+00 : f32
    %75 = vector.broadcast %cst_25 : f32 to vector<1x8x8xf32>
    %76 = arith.subf %75, %1 : vector<1x8x8xf32>
    %77 = arith.mulf %76, %74 : vector<1x8x8xf32>
    %78 = arith.addf %1, %77 : vector<1x8x8xf32>
    %c0_26 = arith.constant 0 : index
    %c0_27 = arith.constant 0 : index
    %c0_28 = arith.constant 0 : index
    %79 = vector.load %arg8[%c0_26, %c0_27, %c0_28] : memref<1x8x8xf32, #tpu.memory_space<vmem>>, vector<1x8x8xf32>
    tpu.vector_store %arg8[%c0_26, %c0_27, %c0_28], %78 {strides = array<i32>} : memref<1x8x8xf32, #tpu.memory_space<vmem>>, vector<1x8x8xf32>,
    %cst_29 = arith.constant 1.000000e+00 : f32
    %80 = vector.shape_cast %35 : vector<8x8xi1> to vector<1x8x8xi1>
    %81 = vector.broadcast %cst_29 : f32 to vector<1x8x8xf32>
    %82 = arith.select %80, %78, %81 : vector<1x8x8xi1>, vector<1x8x8xf32>
    %cst_30 = arith.constant 1.000000e+00 : f32
    %83 = vector.broadcast %cst_30 : f32 to vector<1x8x1xf32>
    %cst_31 = arith.constant 0.000000e+00 : f32
    %84 = vector.broadcast %cst_31 : f32 to vector<1x8x8xf32>
    %85 = vector.extract_strided_slice %82 {offsets = [0, 0, 0], sizes = [1, 8, 1], strides = [1, 1, 1]} : vector<1x8x8xf32> to vector<1x8x1xf32>
    %86 = arith.mulf %83, %85 : vector<1x8x1xf32>
    %c0_i32 = arith.constant 0 : i32
    %87 = vector.broadcast %c0_i32 : i32 to vector<8x8xi32>
    %88 = arith.cmpi eq, %34, %87 : vector<8x8xi32>
    %89 = vector.shape_cast %88 : vector<8x8xi1> to vector<1x8x8xi1>
    %90 = vector.shape_cast %86 : vector<1x8x1xf32> to vector<1x8x1xf32>
    %91 = vector.broadcast %90 : vector<1x8x1xf32> to vector<1x8x8xf32>
    %92 = arith.select %89, %91, %84 : vector<1x8x8xi1>, vector<1x8x8xf32>
    %93 = vector.extract_strided_slice %82 {offsets = [0, 0, 1], sizes = [1, 8, 1], strides = [1, 1, 1]} : vector<1x8x8xf32> to vector<1x8x1xf32>
    %94 = arith.mulf %86, %93 : vector<1x8x1xf32>
    %c1_i32_32 = arith.constant 1 : i32
    %95 = vector.broadcast %c1_i32_32 : i32 to vector<8x8xi32>
    %96 = arith.cmpi eq, %34, %95 : vector<8x8xi32>
    %97 = vector.shape_cast %96 : vector<8x8xi1> to vector<1x8x8xi1>
    %98 = vector.shape_cast %94 : vector<1x8x1xf32> to vector<1x8x1xf32>
    %99 = vector.broadcast %98 : vector<1x8x1xf32> to vector<1x8x8xf32>
    %100 = arith.select %97, %99, %92 : vector<1x8x8xi1>, vector<1x8x8xf32>
    %101 = vector.extract_strided_slice %82 {offsets = [0, 0, 2], sizes = [1, 8, 1], strides = [1, 1, 1]} : vector<1x8x8xf32> to vector<1x8x1xf32>
    %102 = arith.mulf %94, %101 : vector<1x8x1xf32>
    %c2_i32 = arith.constant 2 : i32
    %103 = vector.broadcast %c2_i32 : i32 to vector<8x8xi32>
    %104 = arith.cmpi eq, %34, %103 : vector<8x8xi32>
    %105 = vector.shape_cast %104 : vector<8x8xi1> to vector<1x8x8xi1>
    %106 = vector.shape_cast %102 : vector<1x8x1xf32> to vector<1x8x1xf32>
    %107 = vector.broadcast %106 : vector<1x8x1xf32> to vector<1x8x8xf32>
    %108 = arith.select %105, %107, %100 : vector<1x8x8xi1>, vector<1x8x8xf32>
    %109 = vector.extract_strided_slice %82 {offsets = [0, 0, 3], sizes = [1, 8, 1], strides = [1, 1, 1]} : vector<1x8x8xf32> to vector<1x8x1xf32>
    %110 = arith.mulf %102, %109 : vector<1x8x1xf32>
    %c3_i32 = arith.constant 3 : i32
    %111 = vector.broadcast %c3_i32 : i32 to vector<8x8xi32>
    %112 = arith.cmpi eq, %34, %111 : vector<8x8xi32>
    %113 = vector.shape_cast %112 : vector<8x8xi1> to vector<1x8x8xi1>
    %114 = vector.shape_cast %110 : vector<1x8x1xf32> to vector<1x8x1xf32>
    %115 = vector.broadcast %114 : vector<1x8x1xf32> to vector<1x8x8xf32>
    %116 = arith.select %113, %115, %108 : vector<1x8x8xi1>, vector<1x8x8xf32>
    %117 = vector.extract_strided_slice %82 {offsets = [0, 0, 4], sizes = [1, 8, 1], strides = [1, 1, 1]} : vector<1x8x8xf32> to vector<1x8x1xf32>
    %118 = arith.mulf %110, %117 : vector<1x8x1xf32>
    %c4_i32 = arith.constant 4 : i32
    %119 = vector.broadcast %c4_i32 : i32 to vector<8x8xi32>
    %120 = arith.cmpi eq, %34, %119 : vector<8x8xi32>
    %121 = vector.shape_cast %120 : vector<8x8xi1> to vector<1x8x8xi1>
    %122 = vector.shape_cast %118 : vector<1x8x1xf32> to vector<1x8x1xf32>
    %123 = vector.broadcast %122 : vector<1x8x1xf32> to vector<1x8x8xf32>
    %124 = arith.select %121, %123, %116 : vector<1x8x8xi1>, vector<1x8x8xf32>
    %125 = vector.extract_strided_slice %82 {offsets = [0, 0, 5], sizes = [1, 8, 1], strides = [1, 1, 1]} : vector<1x8x8xf32> to vector<1x8x1xf32>
    %126 = arith.mulf %118, %125 : vector<1x8x1xf32>
    %c5_i32 = arith.constant 5 : i32
    %127 = vector.broadcast %c5_i32 : i32 to vector<8x8xi32>
    %128 = arith.cmpi eq, %34, %127 : vector<8x8xi32>
    %129 = vector.shape_cast %128 : vector<8x8xi1> to vector<1x8x8xi1>
    %130 = vector.shape_cast %126 : vector<1x8x1xf32> to vector<1x8x1xf32>
    %131 = vector.broadcast %130 : vector<1x8x1xf32> to vector<1x8x8xf32>
    %132 = arith.select %129, %131, %124 : vector<1x8x8xi1>, vector<1x8x8xf32>
    %133 = vector.extract_strided_slice %82 {offsets = [0, 0, 6], sizes = [1, 8, 1], strides = [1, 1, 1]} : vector<1x8x8xf32> to vector<1x8x1xf32>
    %134 = arith.mulf %126, %133 : vector<1x8x1xf32>
    %c6_i32 = arith.constant 6 : i32
    %135 = vector.broadcast %c6_i32 : i32 to vector<8x8xi32>
    %136 = arith.cmpi eq, %34, %135 : vector<8x8xi32>
    %137 = vector.shape_cast %136 : vector<8x8xi1> to vector<1x8x8xi1>
    %138 = vector.shape_cast %134 : vector<1x8x1xf32> to vector<1x8x1xf32>
    %139 = vector.broadcast %138 : vector<1x8x1xf32> to vector<1x8x8xf32>
    %140 = arith.select %137, %139, %132 : vector<1x8x8xi1>, vector<1x8x8xf32>
    %141 = vector.extract_strided_slice %82 {offsets = [0, 0, 7], sizes = [1, 8, 1], strides = [1, 1, 1]} : vector<1x8x8xf32> to vector<1x8x1xf32>
    %142 = arith.mulf %134, %141 : vector<1x8x1xf32>
    %c7_i32 = arith.constant 7 : i32
    %143 = vector.broadcast %c7_i32 : i32 to vector<8x8xi32>
    %144 = arith.cmpi eq, %34, %143 : vector<8x8xi32>
    %145 = vector.shape_cast %144 : vector<8x8xi1> to vector<1x8x8xi1>
    %146 = vector.shape_cast %142 : vector<1x8x1xf32> to vector<1x8x1xf32>
    %147 = vector.broadcast %146 : vector<1x8x1xf32> to vector<1x8x8xf32>
    %148 = arith.select %145, %147, %140 : vector<1x8x8xi1>, vector<1x8x8xf32>
    %cst_33 = arith.constant 0.000000e+00 : f32
    %149 = vector.shape_cast %35 : vector<8x8xi1> to vector<1x8x8xi1>
    %150 = vector.broadcast %cst_33 : f32 to vector<1x8x8xf32>
    %151 = arith.select %149, %148, %150 : vector<1x8x8xi1>, vector<1x8x8xf32>
    %152 = arith.cmpi eq, %33, %34 : vector<8x8xi32>
    %153 = vector.shape_cast %151 : vector<1x8x8xf32> to vector<8x8xf32>
    %154 = tpu.transpose %153, [1, 0] : vector<8x8xf32> -> vector<8x8xf32>
    %155 = arith.addf %153, %154 : vector<8x8xf32>
    %cst_34 = arith.constant 1.000000e+00 : f32
    %156 = vector.broadcast %cst_34 : f32 to vector<8x8xf32>
    %157 = arith.select %152, %156, %155 : vector<8x8xi1>, vector<8x8xf32>
    %c0_35 = arith.constant 0 : index
    %c0_36 = arith.constant 0 : index
    %c0_37 = arith.constant 0 : index
    %158 = vector.load %arg7[%c0_35, %c0_36, %c0_37] : memref<1x8x8xf32, #tpu.memory_space<vmem>>, vector<1x8x8xf32>
    %159 = vector.shape_cast %158 : vector<1x8x8xf32> to vector<8x8xf32>
    %160 = vector.shape_cast %157 : vector<8x8xf32> to vector<1x8x8xf32>
    tpu.vector_store %arg7[%c0_35, %c0_36, %c0_37], %160 {strides = array<i32>} : memref<1x8x8xf32, #tpu.memory_space<vmem>>, vector<1x8x8xf32>,
    return
  }
  func.func @transform_0(%arg0: i32) -> (i32, i32, i32) {
    %c0_i32 = arith.constant 0 : i32
    %c0_i32_0 = arith.constant 0 : i32
    %c0_i32_1 = arith.constant 0 : i32
    return %arg0, %c0_i32, %c0_i32_0 : i32, i32, i32
  }
  func.func @transform_1(%arg0: i32) -> (i32, i32, i32) {
    %c0_i32 = arith.constant 0 : i32
    %c0_i32_0 = arith.constant 0 : i32
    %c0_i32_1 = arith.constant 0 : i32
    return %arg0, %c0_i32, %c0_i32_0 : i32, i32, i32
  }
  func.func @transform_2(%arg0: i32) -> (i32, i32) {
    %c0_i32 = arith.constant 0 : i32
    %c0_i32_0 = arith.constant 0 : i32
    %c0_i32_1 = arith.constant 0 : i32
    return %c0_i32, %c0_i32_0 : i32, i32
  }
  func.func @transform_3(%arg0: i32) -> (i32, i32) {
    %c0_i32 = arith.constant 0 : i32
    %c0_i32_0 = arith.constant 0 : i32
    %c0_i32_1 = arith.constant 0 : i32
    return %c0_i32, %c0_i32_0 : i32, i32
  }
  func.func @transform_4(%arg0: i32) -> (i32, i32) {
    %c0_i32 = arith.constant 0 : i32
    %c0_i32_0 = arith.constant 0 : i32
    %c0_i32_1 = arith.constant 0 : i32
    return %c0_i32, %c0_i32_0 : i32, i32
  }
  func.func @transform_5(%arg0: i32) -> (i32, i32) {
    %c0_i32 = arith.constant 0 : i32
    %c0_i32_0 = arith.constant 0 : i32
    %c0_i32_1 = arith.constant 0 : i32
    return %c0_i32, %c0_i32_0 : i32, i32
  }
  func.func @transform_6(%arg0: i32) -> (i32, i32, i32) {
    %c0_i32 = arith.constant 0 : i32
    %c0_i32_0 = arith.constant 0 : i32
    %c0_i32_1 = arith.constant 0 : i32
    return %arg0, %c0_i32, %c0_i32_0 : i32, i32, i32
  }
  func.func @transform_7(%arg0: i32) -> (i32, i32, i32) {
    %c0_i32 = arith.constant 0 : i32
    %c0_i32_0 = arith.constant 0 : i32
    %c0_i32_1 = arith.constant 0 : i32
    return %arg0, %c0_i32, %c0_i32_0 : i32, i32, i32
  }
}

</mosaic_0001>

<llo_original>
// kernel: tpu_custom_call.1
$region0: #{tpu_custom_call.1}
  #allocation0 [shape = 'u32[]', space=smem, size = 0x4, offset = 0x4, fixed_abs, tag = 'smem constant byte address 0x4 - core index']
  #allocation1 [shape = 'u32[72,128]{1,0:T(1,128)}', space=vmem, size = 0x9000, scoped, tag = 'internal scratch']
  #allocation2 [shape = 'f32[1,1]{1,0:T(1,128)S(1)}', space=vmem, size = 0x200, scoped, tag = 'scoped memory for tpu_custom_call.1']
  %s0 = inlined_call_operand.hbm [shape: f32[2,8,32], index: 0, kind: input, shape index: {}]
  %s1 = inlined_call_operand.hbm [shape: f32[2,8,8], index: 1, kind: input, shape index: {}]
  %s2 = inlined_call_operand.vmem [shape: f32[1,32], index: 2, kind: input, shape index: {}]
  %s3 = inlined_call_operand.vmem [shape: f32[1,32], index: 3, kind: input, shape index: {}]
  %s4 = inlined_call_operand.vmem [shape: f32[2,32], index: 4, kind: input, shape index: {}]
  %s5 = inlined_call_operand.<no memory space> [shape: f32[1,1], index: 5, kind: input, shape index: {}]
  %s6 = inlined_call_operand.hbm [shape: f32[2,8,8], index: 6, kind: output, shape index: {0}]
  %s7 = inlined_call_operand.hbm [shape: f32[2,8,8], index: 7, kind: output, shape index: {1}]
  %8 = xla_tuple %s6, %s7
  %s9 = sld [smem:[#allocation0]]
  $region73: #{tpu_custom_call.1} parent=0
    _
  %s11 = ssub.s32 1, %s9
  %s12 = scalar_select 0, %s11, %s9
  %v13 = vstv %s5
  %14 = vst [vmem:[#allocation2] sm:$0x1] %v13
  $region1: #{tpu_custom_call.1} parent=0
    #allocation3 [shape = 'u8[8192]{0}', space=vmem, size = 0x2000, scoped, tag = 'input window, operand 0']
    #allocation4 [shape = 's32[2]{0}', space=sflag, size = 0x8, scoped, tag = 'scoped memory for tpu_custom_call.1']
    #allocation5 [shape = 's32[2]{0}', space=sflag, size = 0x8, scoped, tag = 'scoped memory for tpu_custom_call.1']
    #allocation6 [shape = 'u8[8192]{0}', space=vmem, size = 0x2000, scoped, tag = 'input window, operand 1']
    #allocation7 [shape = 's32[2]{0}', space=sflag, size = 0x8, scoped, tag = 'scoped memory for tpu_custom_call.1']
    #allocation8 [shape = 'u8[8192]{0}', space=vmem, size = 0x2000, scoped, tag = 'output window, operand 0']
    #allocation9 [shape = 'u8[8192]{0}', space=vmem, size = 0x2000, scoped, tag = 'output window, operand 1']
    #allocation10 [shape = 's32[2]{0}', space=sflag, size = 0x8, scoped, tag = 'scoped memory for tpu_custom_call.1']
    %15 = vsyncpa [#allocation4], 0
    %s16 = scalar_lea.sflag [#allocation4], 1
    %17 = vsyncpa %s16, 0
    %18 = vsyncpa [#allocation7], 0
    %s19 = scalar_lea.sflag [#allocation7], 1
    %20 = vsyncpa %s19, 0
    %21 = vsyncpa [#allocation5], 0
    %s22 = scalar_lea.sflag [#allocation5], 1
    %23 = vsyncpa %s22, 0
    %24 = vsyncpa [#allocation10], 0
    %s25 = scalar_lea.sflag [#allocation10], 1
    %26 = vsyncpa %s25, 0
    loop: start=0, step=1, limit=4
    $region2: #{tpu_custom_call.1} parent=1 // loop_pre_header
      _
    $region3: #{tpu_custom_call.1} parent=1 // loop_header
      %s28 = sphi 0, %s32
      %p29 = scmp.ge.s32.totalorder %s28, 4
      %s38 = sphi 0, %s40
      %s41 = sphi 0, %s38
      %s42 = sphi 0, %s41
      %s58 = sphi 0, %s42
      %s64 = sphi 0, %s66
      %s67 = sphi 0, %s64
      %s68 = sphi 0, %s67
      %s84 = sphi 0, %s68
      %s88 = sphi 0, %s88
      %s90 = sphi 0, %s88
      %s91 = sphi 0, %s90
      %s105 = sphi 0, %s91
      %s109 = sphi 0, %s109
      %s111 = sphi 0, %s109
      %s112 = sphi 0, %s111
      %s126 = sphi 0, %s112
      %s130 = sphi 0, %s130
      %s132 = sphi 0, %s130
      %s133 = sphi 0, %s132
      %s147 = sphi 0, %s133
      %s151 = sphi 0, %s151
      %s153 = sphi 0, %s151
      %s154 = sphi 0, %s153
      %s168 = sphi 0, %s154
      %s174 = sphi 0, %s176
      %s177 = sphi 0, %s174
      %s178 = sphi 0, %s177
      %s194 = sphi 0, %s178
      %s200 = sphi 0, %s202
      %s203 = sphi 0, %s200
      %s204 = sphi 0, %s203
      %s220 = sphi 0, %s204
    $region4: #{tpu_custom_call.1} parent=1 // loop_header_branch
      %31 = sbr.rel (%p29) target = $region8
    $region5: #{tpu_custom_call.1} parent=1 // loop_body
      %s33 = ssub.s32 %s28, 1
      %s34 = ssub.s32 %s28, 2
      %s35 = sadd.s32 %s28, 1
      %s36 = ssub.s32 %s28, %s35
      %p37 = scmp.eq.s32.totalorder %s36, 0
      %s39 = sadd.s32 %s38, 1
      %s40 = scalar_select %p37, %s38, %s39
      %p43 = pneg %p37
      %p44 = scmp.eq.s32.totalorder %s28, 1
      %p45 = por %p43, %p44
      %p46 = scmp.ne.s32.totalorder %s38, %s41
      %p47 = scmp.eq.s32.totalorder %s28, 0
      %p48 = por %p46, %p47
      %p49 = scmp.ne.s32.totalorder %s38, %s41
      %p50 = scmp.eq.s32.totalorder %s33, 1
      %p51 = por %p49, %p50
      %p52 = scmp.ne.s32.totalorder %s41, %s42
      %p53 = scmp.eq.s32.totalorder %s33, 0
      %p54 = por %p52, %p53
      %p55 = scmp.ne.s32.totalorder %s41, %s42
      %p56 = scmp.eq.s32.totalorder %s34, 1
      %p57 = por %p55, %p56
      %p59 = scmp.ne.s32.totalorder %s42, %s58
      %p60 = scmp.eq.s32.totalorder %s34, 0
      %p61 = por %p59, %p60
      %s62 = ssub.s32 %s28, %s35
      %p63 = scmp.eq.s32.totalorder %s62, 0
      %s65 = sadd.s32 %s64, 1
      %s66 = scalar_select %p63, %s64, %s65
      %p69 = pneg %p63
      %p70 = scmp.eq.s32.totalorder %s28, 1
      %p71 = por %p69, %p70
      %p72 = scmp.ne.s32.totalorder %s64, %s67
      %p73 = scmp.eq.s32.totalorder %s28, 0
      %p74 = por %p72, %p73
      %p75 = scmp.ne.s32.totalorder %s64, %s67
      %p76 = scmp.eq.s32.totalorder %s33, 1
      %p77 = por %p75, %p76
      %p78 = scmp.ne.s32.totalorder %s67, %s68
      %p79 = scmp.eq.s32.totalorder %s33, 0
      %p80 = por %p78, %p79
      %p81 = scmp.ne.s32.totalorder %s67, %s68
      %p82 = scmp.eq.s32.totalorder %s34, 1
      %p83 = por %p81, %p82
      %p85 = scmp.ne.s32.totalorder %s68, %s84
      %p86 = scmp.eq.s32.totalorder %s34, 0
      %p87 = por %p85, %p86
      %s89 = sadd.s32 %s88, 1
      %p92 = scmp.eq.s32.totalorder %s28, 1
      %p93 = scmp.ne.s32.totalorder %s88, %s90
      %p94 = scmp.eq.s32.totalorder %s28, 0
      %p95 = por %p93, %p94
      %p96 = scmp.ne.s32.totalorder %s88, %s90
      %p97 = scmp.eq.s32.totalorder %s33, 1
      %p98 = por %p96, %p97
      %p99 = scmp.ne.s32.totalorder %s90, %s91
      %p100 = scmp.eq.s32.totalorder %s33, 0
      %p101 = por %p99, %p100
      %p102 = scmp.ne.s32.totalorder %s90, %s91
      %p103 = scmp.eq.s32.totalorder %s34, 1
      %p104 = por %p102, %p103
      %p106 = scmp.ne.s32.totalorder %s91, %s105
      %p107 = scmp.eq.s32.totalorder %s34, 0
      %p108 = por %p106, %p107
      %s110 = sadd.s32 %s109, 1
      %p113 = scmp.eq.s32.totalorder %s28, 1
      %p114 = scmp.ne.s32.totalorder %s109, %s111
      %p115 = scmp.eq.s32.totalorder %s28, 0
      %p116 = por %p114, %p115
      %p117 = scmp.ne.s32.totalorder %s109, %s111
      %p118 = scmp.eq.s32.totalorder %s33, 1
      %p119 = por %p117, %p118
      %p120 = scmp.ne.s32.totalorder %s111, %s112
      %p121 = scmp.eq.s32.totalorder %s33, 0
      %p122 = por %p120, %p121
      %p123 = scmp.ne.s32.totalorder %s111, %s112
      %p124 = scmp.eq.s32.totalorder %s34, 1
      %p125 = por %p123, %p124
      %p127 = scmp.ne.s32.totalorder %s112, %s126
      %p128 = scmp.eq.s32.totalorder %s34, 0
      %p129 = por %p127, %p128
      %s131 = sadd.s32 %s130, 1
      %p134 = scmp.eq.s32.totalorder %s28, 1
      %p135 = scmp.ne.s32.totalorder %s130, %s132
      %p136 = scmp.eq.s32.totalorder %s28, 0
      %p137 = por %p135, %p136
      %p138 = scmp.ne.s32.totalorder %s130, %s132
      %p139 = scmp.eq.s32.totalorder %s33, 1
      %p140 = por %p138, %p139
      %p141 = scmp.ne.s32.totalorder %s132, %s133
      %p142 = scmp.eq.s32.totalorder %s33, 0
      %p143 = por %p141, %p142
      %p144 = scmp.ne.s32.totalorder %s132, %s133
      %p145 = scmp.eq.s32.totalorder %s34, 1
      %p146 = por %p144, %p145
      %p148 = scmp.ne.s32.totalorder %s133, %s147
      %p149 = scmp.eq.s32.totalorder %s34, 0
      %p150 = por %p148, %p149
      %s152 = sadd.s32 %s151, 1
      %p155 = scmp.eq.s32.totalorder %s28, 1
      %p156 = scmp.ne.s32.totalorder %s151, %s153
      %p157 = scmp.eq.s32.totalorder %s28, 0
      %p158 = por %p156, %p157
      %p159 = scmp.ne.s32.totalorder %s151, %s153
      %p160 = scmp.eq.s32.totalorder %s33, 1
      %p161 = por %p159, %p160
      %p162 = scmp.ne.s32.totalorder %s153, %s154
      %p163 = scmp.eq.s32.totalorder %s33, 0
      %p164 = por %p162, %p163
      %p165 = scmp.ne.s32.totalorder %s153, %s154
      %p166 = scmp.eq.s32.totalorder %s34, 1
      %p167 = por %p165, %p166
      %p169 = scmp.ne.s32.totalorder %s154, %s168
      %p170 = scmp.eq.s32.totalorder %s34, 0
      %p171 = por %p169, %p170
      %s172 = ssub.s32 %s28, %s35
      %p173 = scmp.eq.s32.totalorder %s172, 0
      %s175 = sadd.s32 %s174, 1
      %s176 = scalar_select %p173, %s174, %s175
      %p179 = pneg %p173
      %p180 = scmp.eq.s32.totalorder %s28, 1
      %p181 = por %p179, %p180
      %p182 = scmp.ne.s32.totalorder %s174, %s177
      %p183 = scmp.eq.s32.totalorder %s28, 0
      %p184 = por %p182, %p183
      %p185 = scmp.ne.s32.totalorder %s174, %s177
      %p186 = scmp.eq.s32.totalorder %s33, 1
      %p187 = por %p185, %p186
      %p188 = scmp.ne.s32.totalorder %s177, %s178
      %p189 = scmp.eq.s32.totalorder %s33, 0
      %p190 = por %p188, %p189
      %p191 = scmp.ne.s32.totalorder %s177, %s178
      %p192 = scmp.eq.s32.totalorder %s34, 1
      %p193 = por %p191, %p192
      %p195 = scmp.ne.s32.totalorder %s178, %s194
      %p196 = scmp.eq.s32.totalorder %s34, 0
      %p197 = por %p195, %p196
      %s198 = ssub.s32 %s28, %s35
      %p199 = scmp.eq.s32.totalorder %s198, 0
      %s201 = sadd.s32 %s200, 1
      %s202 = scalar_select %p199, %s200, %s201
      %p205 = pneg %p199
      %p206 = scmp.eq.s32.totalorder %s28, 1
      %p207 = por %p205, %p206
      %p208 = scmp.ne.s32.totalorder %s200, %s203
      %p209 = scmp.eq.s32.totalorder %s28, 0
      %p210 = por %p208, %p209
      %p211 = scmp.ne.s32.totalorder %s200, %s203
      %p212 = scmp.eq.s32.totalorder %s33, 1
      %p213 = por %p211, %p212
      %p214 = scmp.ne.s32.totalorder %s203, %s204
      %p215 = scmp.eq.s32.totalorder %s33, 0
      %p216 = por %p214, %p215
      %p217 = scmp.ne.s32.totalorder %s203, %s204
      %p218 = scmp.eq.s32.totalorder %s34, 1
      %p219 = por %p217, %p218
      %p221 = scmp.ne.s32.totalorder %s204, %s220
      %p222 = scmp.eq.s32.totalorder %s34, 0
      %p223 = por %p221, %p222
      %p224 = scmp.le.s32.totalorder 1, %s28
      %p225 = scmp.lt.s32.totalorder %s28, 3
      %p226 = pnand %p224, %p225
      %p227 = pneg %p226
      // Predicated region
      $region9: #{tpu_custom_call.1} parent=5 // pred_check
        _
      $region10: #{tpu_custom_call.1} parent=5 // pred_check_branch
        %229 = sbr.rel (%p226) target = $region12
      $region11: #{tpu_custom_call.1} parent=5 // pred_region
        %s230 = ssub.s32 %s28, 1
        // Predicated region
        $region13: #{tpu_custom_call.1} parent=11 // pred_check
          %p231 = pneg %p101
        $region14: #{tpu_custom_call.1} parent=11 // pred_check_branch
          %233 = sbr.rel (%p231) target = $region16
        $region15: #{tpu_custom_call.1} parent=11 // pred_region
          _
        $region16: #{tpu_custom_call.1} parent=11 // pred_fallthru
          _
        // Predicated region
        $region17: #{tpu_custom_call.1} parent=11 // pred_check
          %p234 = pneg %p122
        $region18: #{tpu_custom_call.1} parent=11 // pred_check_branch
          %236 = sbr.rel (%p234) target = $region20
        $region19: #{tpu_custom_call.1} parent=11 // pred_region
          _
        $region20: #{tpu_custom_call.1} parent=11 // pred_fallthru
          _
        // Predicated region
        $region21: #{tpu_custom_call.1} parent=11 // pred_check
          %p237 = pneg %p143
        $region22: #{tpu_custom_call.1} parent=11 // pred_check_branch
          %239 = sbr.rel (%p237) target = $region24
        $region23: #{tpu_custom_call.1} parent=11 // pred_region
          _
        $region24: #{tpu_custom_call.1} parent=11 // pred_fallthru
          _
        // Predicated region
        $region25: #{tpu_custom_call.1} parent=11 // pred_check
          %p240 = pneg %p164
        $region26: #{tpu_custom_call.1} parent=11 // pred_check_branch
          %242 = sbr.rel (%p240) target = $region28
        $region27: #{tpu_custom_call.1} parent=11 // pred_region
          _
        $region28: #{tpu_custom_call.1} parent=11 // pred_fallthru
          _
      $region12: #{tpu_custom_call.1} parent=5 // pred_fallthru
        _
      %p243 = scmp.lt.s32.totalorder %s28, 2
      // Predicated region
      $region29: #{tpu_custom_call.1} parent=5 // pred_check
        %p244 = pneg %p243
      $region30: #{tpu_custom_call.1} parent=5 // pred_check_branch
        %246 = sbr.rel (%p244) target = $region32
      $region31: #{tpu_custom_call.1} parent=5 // pred_region
        // Predicated region
        $region33: #{tpu_custom_call.1} parent=31 // pred_check
          %p247 = pneg %p48
        $region34: #{tpu_custom_call.1} parent=31 // pred_check_branch
          %249 = sbr.rel (%p247) target = $region36
        $region35: #{tpu_custom_call.1} parent=31 // pred_region
          %s250 = sand.u32 %s38, 1
          %s251 = scalar_lea.sflag [#allocation4], %s250
          %s252 = sand.u32 %s38, 1
          %s253 = smul.addr %s252, 8
          %s254 = scalar_lea.vmem [#allocation3], %s253
          %256 = vsyncadd %s251, 0
          %s257 = smul.addr %s28, 8
          %s258 = scalar_lea.hbm %s0, %s257
          %s260 = sshll.u32 %s258, 4
          %s261 = int_to_ptr.hbm [resolvable:$true] %s260
          %s262 = sshll.u32 %s254, 4
          %s263 = int_to_ptr.vmem [resolvable:$true] %s262
          %265 = dma.hbm_to_vmem [thread:$0]  %s261, 128, %s263, %s251
        $region36: #{tpu_custom_call.1} parent=31 // pred_fallthru
          _
        // Predicated region
        $region37: #{tpu_custom_call.1} parent=31 // pred_check
          %p266 = pneg %p74
        $region38: #{tpu_custom_call.1} parent=31 // pred_check_branch
          %268 = sbr.rel (%p266) target = $region40
        $region39: #{tpu_custom_call.1} parent=31 // pred_region
          %s269 = sand.u32 %s64, 1
          %s270 = scalar_lea.sflag [#allocation7], %s269
          %s271 = sand.u32 %s64, 1
          %s272 = smul.addr %s271, 8
          %s273 = scalar_lea.vmem [#allocation6], %s272
          %275 = vsyncadd %s270, 0
          %s276 = smul.addr %s28, 8
          %s277 = scalar_lea.hbm %s1, %s276
          %s279 = sshll.u32 %s277, 4
          %s280 = int_to_ptr.hbm [resolvable:$true] %s279
          %s281 = sshll.u32 %s273, 4
          %s282 = int_to_ptr.vmem [resolvable:$true] %s281
          %284 = dma.hbm_to_vmem [thread:$0]  %s280, 128, %s282, %s270
        $region40: #{tpu_custom_call.1} parent=31 // pred_fallthru
          _
      $region32: #{tpu_custom_call.1} parent=5 // pred_fallthru
        _
      %p285 = scmp.le.s32.totalorder 1, %s28
      %p286 = scmp.lt.s32.totalorder %s28, 3
      %p287 = pnand %p285, %p286
      %p288 = pneg %p287
      // Predicated region
      $region41: #{tpu_custom_call.1} parent=5 // pred_check
        _
      $region42: #{tpu_custom_call.1} parent=5 // pred_check_branch
        %290 = sbr.rel (%p287) target = $region44
      $region43: #{tpu_custom_call.1} parent=5 // pred_region
        %s291 = ssub.s32 %s28, 1
        %s292 = sand.u32 %s41, 1
        %s293 = scalar_lea.sflag [#allocation4], %s292
        %s294 = sand.u32 %s41, 1
        %s295 = smul.addr %s294, 8
        %s296 = scalar_lea.vmem [#allocation3], %s295
        // Predicated region
        $region45: #{tpu_custom_call.1} parent=43 // pred_check
          %p297 = pneg %p54
        $region46: #{tpu_custom_call.1} parent=43 // pred_check_branch
          %299 = sbr.rel (%p297) target = $region48
        $region47: #{tpu_custom_call.1} parent=43 // pred_region
          %301 = dma.done %s293, 128
        $region48: #{tpu_custom_call.1} parent=43 // pred_fallthru
          _
        %s302 = sand.u32 %s67, 1
        %s303 = scalar_lea.sflag [#allocation7], %s302
        %s304 = sand.u32 %s67, 1
        %s305 = smul.addr %s304, 8
        %s306 = scalar_lea.vmem [#allocation6], %s305
        // Predicated region
        $region49: #{tpu_custom_call.1} parent=43 // pred_check
          %p307 = pneg %p80
        $region50: #{tpu_custom_call.1} parent=43 // pred_check_branch
          %309 = sbr.rel (%p307) target = $region52
        $region51: #{tpu_custom_call.1} parent=43 // pred_region
          %311 = dma.done %s303, 128
        $region52: #{tpu_custom_call.1} parent=43 // pred_fallthru
          _
        %s312 = sand.u32 %s41, 1
        %s313 = scalar_lea.sflag [#allocation4], %s312
        %s314 = sand.u32 %s41, 1
        %s315 = smul.addr %s314, 8
        %s316 = scalar_lea.vmem [#allocation3], %s315
        %p317 = pneg %p54
        %p318 = pneg %p51
        %s319 = sand.u32 %s67, 1
        %s320 = scalar_lea.sflag [#allocation7], %s319
        %s321 = sand.u32 %s67, 1
        %s322 = smul.addr %s321, 8
        %s323 = scalar_lea.vmem [#allocation6], %s322
        %p324 = pneg %p80
        %p325 = pneg %p77
        %p326 = pneg %p101
        %p327 = pneg %p98
        %p328 = pneg %p122
        %p329 = pneg %p119
        %p330 = pneg %p143
        %p331 = pneg %p140
        %p332 = pneg %p164
        %p333 = pneg %p161
        %p334 = pneg %p190
        %p335 = pneg %p187
        %s336 = sand.u32 %s177, 1
        %s337 = scalar_lea.sflag [#allocation5], %s336
        %s338 = sand.u32 %s177, 1
        %s339 = smul.addr %s338, 8
        %s340 = scalar_lea.vmem [#allocation8], %s339
        %p341 = pneg %p216
        %p342 = pneg %p213
        %s343 = sand.u32 %s203, 1
        %s344 = scalar_lea.sflag [#allocation10], %s343
        %s345 = sand.u32 %s203, 1
        %s346 = smul.addr %s345, 8
        %s347 = scalar_lea.vmem [#allocation9], %s346
        %v348 = vld [vmem:[%s296] sm:$0xff]
        %v349 = vld [vmem:[%s306] sm:$0xff]
        %vm350 = vcmask 261120
        %v351 = vsel %vm350, %v348, 0.0
        %352 = vadd.xlane.f32.xlu0 %v351
        %v353 = vpop.xlane.xlu0 %352
        %v354 = vrcp.pop 32.0
        %v355 = vmul.f32 32.0, %v354
        %v356 = vsub.f32 1.0, %v355
        %v357 = vmul.f32 %v354, %v356
        %v358 = vadd.f32 %v354, %v357
        %vm359 = vweird.f32 %v354
        %v360 = vsel %vm359, %v354, %v358
        %v361 = vmul.f32 %v353, %v360
        %v362 = vsub.f32 %v348, %v361
        %v363 = vmul.f32 %v362, %v362
        %v364 = vsel %vm350, %v363, 0.0
        %365 = vadd.xlane.f32.xlu0 %v364
        %v366 = vpop.xlane.xlu0 %365
        %v367 = vrcp.pop 31.0
        %v368 = vmul.f32 31.0, %v367
        %v369 = vsub.f32 1.0, %v368
        %v370 = vmul.f32 %v367, %v369
        %v371 = vadd.f32 %v367, %v370
        %vm372 = vweird.f32 %v367
        %v373 = vsel %vm372, %v367, %v371
        %v374 = vmul.f32 %v366, %v373
        %v375 = vld [vmem:[%s2] sm:$0x1]
        %v377 = vperm.slane %v375, 0
        %v379 = vmul.f32 %v377, %v362
        %v380 = vrsqrt.pop %v374
        %v381 = vmul.f32 %v380, %v374
        %v382 = vmul.f32 %v381, %v380
        %v383 = vmul.f32 0.5, %v382
        %v384 = vsub.f32 1.5, %v383
        %v385 = vmul.f32 %v380, %v384
        %v386 = vmul.f32 %v374, %v385
        %vm387 = vcmp.eq.f32.partialorder %v374, inf
        %v388 = vsel %vm387, %v374, %v386
        %vm389 = vcmp.eq.f32.partialorder %v374, 0.0
        %v390 = vand.u32 %v374, 2147483648
        %v391 = vsel %vm389, %v390, %v388
        %v392 = vadd.f32 %v391, 1e-06
        %v393 = vrcp.pop %v392
        %v394 = vmul.f32 %v392, %v393
        %v395 = vsub.f32 1.0, %v394
        %v396 = vmul.f32 %v393, %v395
        %v397 = vadd.f32 %v393, %v396
        %vm398 = vweird.f32 %v392
        %vm399 = vweird.f32 %v393
        %vm400 = vmor %vm398, %vm399
        %v401 = vsel %vm400, %v393, %v397
        %v402 = vand.u32 2147483647, %v392
        %vm403 = vcmp.eq.f32.partialorder %v402, 8.507059e+37
        %v404 = vand.u32 %v392, 2147483648
        %v405 = vor.u32 1.1754944e-38, %v404
        %v406 = vsel %vm403, %v405, %v401
        %v407 = vmul.f32 %v379, %v406
        %v408 = vld [vmem:[%s3] sm:$0x1]
        %v410 = vperm.slane %v408, 0
        %v412 = vadd.f32 %v407, %v410
        %v413 = vld [vmem:[%s4] sm:$0x3]
        %v415 = vsel %vm350, %v413, 0
        %v418 = vsel %vm350, %v412, 0
        %420 = vmatpush.xpose.msra.mxu0 0.0
        %421 = vmatpush.xpose.msra.mxu0 0.0
        %422 = vmatpush.xpose.msra.mxu0 0.0
        %423 = vmatpush.xpose.msra.mxu0 0.0
        %424 = vmatpush.xpose.msra.mxu0 0.0
        %425 = vmatpush.xpose.msra.mxu0 0.0
        %426 = vmatpush.xpose.msra.mxu0 0.0
        %427 = vmatpush.xpose.msra.mxu0 0.0
        %428 = vmatpush.xpose.msra.mxu0 0.0
        %429 = vmatpush.xpose.msra.mxu0 0.0
        %430 = vmatpush.xpose.msra.mxu0 0.0
        %431 = vmatpush.xpose.msra.mxu0 0.0
        %432 = vmatpush.xpose.msra.mxu0 0.0
        %433 = vmatpush.xpose.msra.mxu0 0.0
        %434 = vmatpush.xpose.msra.mxu0 0.0
        %435 = vmatpush.xpose.msra.mxu0 %v418
        %436 = vmatmul.f32.gmra.mxu0 %v415
        %v437 = vpop.f32.mrf.mxu0
        %v438 = vadd.f32 0.0, %v437
        %439 = vdwg.mxu0
        %v440 = vlaneseq
        %v441 = vshrl.u32 %v440, 7
        %v442 = vlaneseq
        %v443 = vand.u32 %v442, 127
        %vm444 = vcmp.ge.s32.totalorder %v443, %v441
        %v445 = vsel %vm444, 1, 0
        %v446 = vcvt.s32.f32 %v445
        %vm447 = vcmp.lt.s32.totalorder %v443, %v441
        %v448 = vsel %vm447, 1, 0
        %v449 = vcvt.s32.f32 %v448
        %v451 = vrot.slane %v438, 1
        %vm452 = vcmask 64512
        %v453 = vsel %vm452, %v451, 0
        %455 = vmatpush.msra.mxu0 0.0
        %456 = vmatpush.msra.mxu0 0.0
        %457 = vmatpush.msra.mxu0 0.0
        %458 = vmatpush.msra.mxu0 0.0
        %459 = vmatpush.msra.mxu0 0.0
        %460 = vmatpush.msra.mxu0 0.0
        %461 = vmatpush.msra.mxu0 0.0
        %462 = vmatpush.msra.mxu0 0.0
        %463 = vmatpush.msra.mxu0 0.0
        %464 = vmatpush.msra.mxu0 0.0
        %465 = vmatpush.msra.mxu0 0.0
        %466 = vmatpush.msra.mxu0 0.0
        %467 = vmatpush.msra.mxu0 0.0
        %468 = vmatpush.msra.mxu0 0.0
        %469 = vmatpush.msra.mxu0 0.0
        %470 = vmatpush.msra.mxu0 %v446
        %471 = vmatmul.f32.gmra.mxu0 %v453
        %v472 = vpop.f32.mrf.mxu0
        %v473 = vadd.f32 0.0, %v472
        %474 = vdwg.mxu0
        %v475 = vperm.slane %v438, 1
        %v476 = vmul.f32 %v449, %v475
        %v477 = vsel %vm452, %v476, 0.0
        %478 = vadd.xlane.f32.xlu0 %v477
        %v479 = vpop.xlane.xlu0 %478
        %v480 = vsub.s32 %v443, %v441
        %v481 = vadd.s32 %v480, 1
        %v482 = vcvt.s32.f32 %v481
        %v483 = vsel %vm444, %v482, 1.0
        %v484 = vrcp.pop %v483
        %v485 = vmul.f32 %v483, %v484
        %v486 = vsub.f32 1.0, %v485
        %v487 = vmul.f32 %v484, %v486
        %v488 = vadd.f32 %v484, %v487
        %vm489 = vweird.f32 %v483
        %vm490 = vweird.f32 %v484
        %vm491 = vmor %vm489, %vm490
        %v492 = vsel %vm491, %v484, %v488
        %v493 = vand.u32 2147483647, %v483
        %vm494 = vcmp.eq.f32.partialorder %v493, 8.507059e+37
        %v495 = vand.u32 %v483, 2147483648
        %v496 = vor.u32 1.1754944e-38, %v495
        %v497 = vsel %vm494, %v496, %v492
        %v498 = vmul.f32 %v446, %v497
        %v499 = vperm.slane %v473, 0
        %v500 = vsub.f32 %v499, %v479
        %v501 = vmul.f32 %v500, %v498
        %v502 = vperm.slane %v438, 0
        %v503 = vadd.f32 %v502, %v501
        %v504 = vsel %vm444, %v503, 0.0
        %v505 = vld [vmem:[#allocation2] sm:$0x1]
        %v507 = vperm.slane %v505, 0
        %508 = vset.pattern.permute.xlu0 0
        %509 = vperm.xlu0 %508, %v507
        %v510 = vpop.permute.xlu0 %509
        %v512 = vadd.f32 %v504, %v510
        %v513 = vsub.f32 0.0, %v512
        %v514 = vmul.f32 %v513, 1.442695
        %v515 = vpow.pop %v514
        %v516 = vadd.f32 %v515, 1.0
        %v517 = vrcp.pop %v516
        %v518 = vmul.f32 %v516, %v517
        %v519 = vsub.f32 1.0, %v518
        %v520 = vmul.f32 %v517, %v519
        %v521 = vadd.f32 %v517, %v520
        %vm522 = vweird.f32 %v516
        %vm523 = vweird.f32 %v517
        %vm524 = vmor %vm522, %vm523
        %v525 = vsel %vm524, %v517, %v521
        %v526 = vand.u32 2147483647, %v516
        %vm527 = vcmp.eq.f32.partialorder %v526, 8.507059e+37
        %v528 = vand.u32 %v516, 2147483648
        %v529 = vor.u32 1.1754944e-38, %v528
        %v530 = vsel %vm527, %v529, %v525
        %v531 = vmul.f32 1.0, %v530
        %v532 = vsub.f32 1.0, %v349
        %v533 = vmul.f32 %v532, %v531
        %v534 = vadd.f32 %v349, %v533
        %535 = vst.msk [vmem:[%s347] sm:$0xff] %vm452, %v534
        %v536 = vsel %vm444, %v534, 1.0
        %vm537 = vcmp.eq.s32.totalorder %v443, 0
        %539 = vset.pattern.permute.xlu0 0
        %540 = vperm.xlu0 %539, %v536
        %v541 = vpop.permute.xlu0 %540
        %v543 = vsel %vm537, %v541, 0.0
        %544 = vrot.lane.b32.xlu0 %v536, 127
        %v545 = vpop.permute.xlu0 %544
        %v547 = vmul.f32 %v536, %v545
        %vm548 = vcmp.eq.s32.totalorder %v443, 1
        %550 = vset.pattern.permute.xlu0 0
        %551 = vperm.xlu0 %550, %v547
        %v552 = vpop.permute.xlu0 %551
        %v554 = vsel %vm548, %v552, %v543
        %555 = vrot.lane.b32.xlu0 %v536, 126
        %v556 = vpop.permute.xlu0 %555
        %v558 = vmul.f32 %v547, %v556
        %vm559 = vcmp.eq.s32.totalorder %v443, 2
        %561 = vset.pattern.permute.xlu0 0
        %562 = vperm.xlu0 %561, %v558
        %v563 = vpop.permute.xlu0 %562
        %v565 = vsel %vm559, %v563, %v554
        %566 = vrot.lane.b32.xlu0 %v536, 125
        %v567 = vpop.permute.xlu0 %566
        %v569 = vmul.f32 %v558, %v567
        %vm570 = vcmp.eq.s32.totalorder %v443, 3
        %572 = vset.pattern.permute.xlu0 0
        %573 = vperm.xlu0 %572, %v569
        %v574 = vpop.permute.xlu0 %573
        %v576 = vsel %vm570, %v574, %v565
        %577 = vrot.lane.b32.xlu0 %v536, 124
        %v578 = vpop.permute.xlu0 %577
        %v580 = vmul.f32 %v569, %v578
        %vm581 = vcmp.eq.s32.totalorder %v443, 4
        %583 = vset.pattern.permute.xlu0 0
        %584 = vperm.xlu0 %583, %v580
        %v585 = vpop.permute.xlu0 %584
        %v587 = vsel %vm581, %v585, %v576
        %588 = vrot.lane.b32.xlu0 %v536, 123
        %v589 = vpop.permute.xlu0 %588
        %v591 = vmul.f32 %v580, %v589
        %vm592 = vcmp.eq.s32.totalorder %v443, 5
        %594 = vset.pattern.permute.xlu0 0
        %595 = vperm.xlu0 %594, %v591
        %v596 = vpop.permute.xlu0 %595
        %v598 = vsel %vm592, %v596, %v587
        %599 = vrot.lane.b32.xlu0 %v536, 122
        %v600 = vpop.permute.xlu0 %599
        %v602 = vmul.f32 %v591, %v600
        %vm603 = vcmp.eq.s32.totalorder %v443, 6
        %605 = vset.pattern.permute.xlu0 0
        %606 = vperm.xlu0 %605, %v602
        %v607 = vpop.permute.xlu0 %606
        %v609 = vsel %vm603, %v607, %v598
        %610 = vrot.lane.b32.xlu0 %v536, 121
        %v611 = vpop.permute.xlu0 %610
        %v613 = vmul.f32 %v602, %v611
        %vm614 = vcmp.eq.s32.totalorder %v443, 7
        %616 = vset.pattern.permute.xlu0 0
        %617 = vperm.xlu0 %616, %v613
        %v618 = vpop.permute.xlu0 %617
        %v620 = vsel %vm614, %v618, %v609
        %v621 = vsel %vm444, %v620, 0.0
        %vm622 = vcmp.eq.s32.totalorder %v441, %v443
        %623 = vxpose.xlu0.b32.start [1/16] %v621, 128
        %624 = vxpose.xlu0.b32.cont [2/16] 0.0, 128
        %625 = vxpose.xlu0.b32.cont [3/16] 0.0, 128
        %626 = vxpose.xlu0.b32.cont [4/16] 0.0, 128
        %627 = vxpose.xlu0.b32.cont [5/16] 0.0, 128
        %628 = vxpose.xlu0.b32.cont [6/16] 0.0, 128
        %629 = vxpose.xlu0.b32.cont [7/16] 0.0, 128
        %630 = vxpose.xlu0.b32.cont [8/16] 0.0, 128
        %631 = vxpose.xlu0.b32.cont [9/16] 0.0, 128
        %632 = vxpose.xlu0.b32.cont [10/16] 0.0, 128
        %633 = vxpose.xlu0.b32.cont [11/16] 0.0, 128
        %634 = vxpose.xlu0.b32.cont [12/16] 0.0, 128
        %635 = vxpose.xlu0.b32.cont [13/16] 0.0, 128
        %636 = vxpose.xlu0.b32.cont [14/16] 0.0, 128
        %637 = vxpose.xlu0.b32.cont [15/16] 0.0, 128
        %638 = vxpose.xlu0.b32.end [16/16] 0.0, 128
        %v639 = vpop.trf.xlu0
        %v640 = vpop.trf.xlu0
        %v641 = vpop.trf.xlu0
        %v642 = vpop.trf.xlu0
        %v643 = vpop.trf.xlu0
        %v644 = vpop.trf.xlu0
        %v645 = vpop.trf.xlu0
        %v646 = vpop.trf.xlu0
        %v647 = vpop.trf.xlu0
        %v648 = vpop.trf.xlu0
        %v649 = vpop.trf.xlu0
        %v650 = vpop.trf.xlu0
        %v651 = vpop.trf.xlu0
        %v652 = vpop.trf.xlu0
        %v653 = vpop.trf.xlu0
        %v654 = vpop.trf.xlu0
        %v655 = vadd.f32 %v621, %v639
        %v656 = vsel %vm622, 1.0, %v655
        %657 = vst.msk [vmem:[%s340] sm:$0xff] %vm452, %v656
        %s658 = sand.u32 %s177, 1
        %s659 = scalar_lea.sflag [#allocation5], %s658
        %s660 = sand.u32 %s177, 1
        %s661 = smul.addr %s660, 8
        %s662 = scalar_lea.vmem [#allocation8], %s661
        %s663 = sand.u32 %s203, 1
        %s664 = scalar_lea.sflag [#allocation10], %s663
        %s665 = sand.u32 %s203, 1
        %s666 = smul.addr %s665, 8
        %s667 = scalar_lea.vmem [#allocation9], %s666
        // Predicated region
        $region53: #{tpu_custom_call.1} parent=43 // pred_check
          %p668 = pneg %p187
        $region54: #{tpu_custom_call.1} parent=43 // pred_check_branch
          %670 = sbr.rel (%p668) target = $region56
        $region55: #{tpu_custom_call.1} parent=43 // pred_region
          %672 = vsyncadd %s659, 0
          %s673 = smul.addr %s33, 8
          %s674 = scalar_lea.hbm %s6, %s673
          %s676 = sshll.u32 %s662, 4
          %s677 = int_to_ptr.vmem [resolvable:$true] %s676
          %s678 = sshll.u32 %s674, 4
          %s679 = int_to_ptr.hbm [resolvable:$true] %s678
          %681 = dma.vmem_to_hbm [thread:$0]  %s677, 128, %s679, %s659
        $region56: #{tpu_custom_call.1} parent=43 // pred_fallthru
          _
        // Predicated region
        $region57: #{tpu_custom_call.1} parent=43 // pred_check
          %p682 = pneg %p213
        $region58: #{tpu_custom_call.1} parent=43 // pred_check_branch
          %684 = sbr.rel (%p682) target = $region60
        $region59: #{tpu_custom_call.1} parent=43 // pred_region
          %686 = vsyncadd %s664, 0
          %s687 = smul.addr %s33, 8
          %s688 = scalar_lea.hbm %s7, %s687
          %s690 = sshll.u32 %s667, 4
          %s691 = int_to_ptr.vmem [resolvable:$true] %s690
          %s692 = sshll.u32 %s688, 4
          %s693 = int_to_ptr.hbm [resolvable:$true] %s692
          %695 = dma.vmem_to_hbm [thread:$0]  %s691, 128, %s693, %s664
        $region60: #{tpu_custom_call.1} parent=43 // pred_fallthru
          _
      $region44: #{tpu_custom_call.1} parent=5 // pred_fallthru
        _
      %p696 = scmp.le.s32.totalorder 2, %s28
      // Predicated region
      $region61: #{tpu_custom_call.1} parent=5 // pred_check
        %p697 = pneg %p696
      $region62: #{tpu_custom_call.1} parent=5 // pred_check_branch
        %699 = sbr.rel (%p697) target = $region64
      $region63: #{tpu_custom_call.1} parent=5 // pred_region
        %s700 = ssub.s32 %s28, 2
        // Predicated region
        $region65: #{tpu_custom_call.1} parent=63 // pred_check
          %p701 = pneg %p193
        $region66: #{tpu_custom_call.1} parent=63 // pred_check_branch
          %703 = sbr.rel (%p701) target = $region68
        $region67: #{tpu_custom_call.1} parent=63 // pred_region
          %s704 = sand.u32 %s178, 1
          %s705 = scalar_lea.sflag [#allocation5], %s704
          %s706 = sand.u32 %s178, 1
          %s707 = smul.addr %s706, 8
          %s708 = scalar_lea.vmem [#allocation8], %s707
          %710 = dma.done %s705, 128
        $region68: #{tpu_custom_call.1} parent=63 // pred_fallthru
          _
        // Predicated region
        $region69: #{tpu_custom_call.1} parent=63 // pred_check
          %p711 = pneg %p219
        $region70: #{tpu_custom_call.1} parent=63 // pred_check_branch
          %713 = sbr.rel (%p711) target = $region72
        $region71: #{tpu_custom_call.1} parent=63 // pred_region
          %s714 = sand.u32 %s204, 1
          %s715 = scalar_lea.sflag [#allocation10], %s714
          %s716 = sand.u32 %s204, 1
          %s717 = smul.addr %s716, 8
          %s718 = scalar_lea.vmem [#allocation9], %s717
          %720 = dma.done %s715, 128
        $region72: #{tpu_custom_call.1} parent=63 // pred_fallthru
          _
      $region64: #{tpu_custom_call.1} parent=5 // pred_fallthru
        _
    $region6: #{tpu_custom_call.1} parent=1 // loop_footer
      %s32 = sadd.s32 1, %s28
    $region7: #{tpu_custom_call.1} parent=1 // loop_footer_branch
      %27 = sbr.rel target = $region3
    $region8: #{tpu_custom_call.1} parent=1 // loop_exit
      _
    %721 = vsyncpa [#allocation4], 1
    %s722 = scalar_lea.sflag [#allocation4], 1
    %723 = vsyncpa %s722, 1
    %724 = vsyncpa [#allocation7], 1
    %s725 = scalar_lea.sflag [#allocation7], 1
    %726 = vsyncpa %s725, 1
    %727 = vsyncpa [#allocation5], 1
    %s728 = scalar_lea.sflag [#allocation5], 1
    %729 = vsyncpa %s728, 1
    %730 = vsyncpa [#allocation10], 1
    %s731 = scalar_lea.sflag [#allocation10], 1
    %732 = vsyncpa %s731, 1

</llo_original>
